<compile_context>
chip_gen: v5e
topology: v5e:2x2
jax: 0.10.0
libtpu: 0.0.40
codegen_flags: <defaults>
</compile_context>

<pallas_src>
import jax
import jax.numpy as jnp
from jax.experimental import pallas as pl
from jax.experimental.pallas import tpu as pltpu


_SUBLANE = 8
_LANE = 128
_MAX_LANE_TILE = 512                      # lane width target for large D
_OUT_BUF_BUDGET = 4 * 1024 * 1024         # bytes per (double-buffered) out buffer


def _pick_tiles(B, D, C, itemsize):
    """Pick (tb, td) tiles that respect the (8,128) rule and VMEM budget."""
    # Lane (last) axis of the output block: full D when small (block == full
    # dim is always legal), else a large multiple of 128 for unmasked stores.
    if D <= _MAX_LANE_TILE:
        td = D
    else:
        td = _MAX_LANE_TILE
        # Shrink (stays a multiple of 128) only if C is so large that even the
        # minimal (8, C, td) output block would blow the per-buffer budget.
        while td > _LANE and _SUBLANE * C * td * itemsize > _OUT_BUF_BUDGET:
            td //= 2
    # B axis: full B when small, else the largest multiple of 8 keeping the
    # (tb, C, td) output block within the per-buffer VMEM budget.
    max_tb = max(_SUBLANE, _OUT_BUF_BUDGET // (C * td * itemsize))
    max_tb = (max_tb // _SUBLANE) * _SUBLANE
    tb = B if B <= max_tb else max_tb
    return tb, td


def _upsampling_cnn_kernel(x_ref, w_ref, o_ref):
    # x_ref: (tb, td) input tile in VMEM.
    # w_ref: (1, C, 1) weight, resident in VMEM (constant index_map).
    # o_ref: (tb, C, td) lane-dense output tile in VMEM.
    # VPU broadcast multiply; do NOT convert to an MXU matmul (K would be 1).
    o_ref[...] = x_ref[...][:, None, :] * w_ref[...]


def upsampling_cnn(x, conv_weight):
    """Pallas implementation of UpsamplingCNN.forward.

    Args:
      x: (B, D) float array.
      conv_weight: (num_bins, 1, 1, 1) Conv2d filter (PyTorch layout).
    Returns:
      (B, num_bins, D, 1) array, matching the PyTorch module output.
    """
    B, D = x.shape
    C = conv_weight.shape[0]
    itemsize = jnp.dtype(x.dtype).itemsize
    w = conv_weight.reshape(1, C, 1).astype(x.dtype)   # (1, C, 1)

    tb, td = _pick_tiles(B, D, C, itemsize)
    grid = (pl.cdiv(B, tb), pl.cdiv(D, td))

    out = pl.pallas_call(
        _upsampling_cnn_kernel,
        out_shape=jax.ShapeDtypeStruct((B, C, D), x.dtype),
        grid=grid,
        in_specs=[
            # Input tile: streams through double-buffered VMEM.
            pl.BlockSpec((tb, td), lambda i, j: (i, j)),
            # Weight: constant index_map -> DMA'd once, resident for the
            # whole grid (no per-step re-fetch).
            pl.BlockSpec((1, C, 1), lambda i, j: (0, 0, 0)),
        ],
        # Output tile: lane-dense (td is full D or a multiple of 128), full C
        # on the sublane-adjacent axis, tb on the leading axis.
        out_specs=pl.BlockSpec((tb, C, td), lambda i, j: (i, 0, j)),
        compiler_params=pltpu.CompilerParams(
            dimension_semantics=("parallel", "parallel"),
            vmem_limit_bytes=48 * 1024 * 1024,
        ),
        cost_estimate=pl.CostEstimate(
            flops=B * C * D,
            transcendentals=0,
            bytes_accessed=(B * D + B * C * D + C) * itemsize,
        ),
    )(x, w)

    # Free reshape to the PyTorch NCHW output (B, C, H=D, W=1).
    return out[..., None]


def upsampling_cnn_reference(x, conv_weight):
    """Plain-JAX reference (mirrors the PyTorch forward)."""
    B, D = x.shape
    C = conv_weight.shape[0]
    x_reshape = x.reshape(B, 1, D, 1)                      # (B, 1, D, 1)
    w = conv_weight.reshape(1, C, 1, 1).astype(x.dtype)    # 1x1 conv, no bias
    return x_reshape * w                                   # (B, C, D, 1)


if __name__ == "__main__":
    key = jax.random.PRNGKey(0)
    kx1, kw, kx2 = jax.random.split(key, 3)

    num_bins = 8
    conv_weight = jax.random.normal(kw, (num_bins, 1, 1, 1), dtype=jnp.float32)

    # Case 1: tiny shapes matching the original module usage (single block).
    B1, D1 = 2, 16
    x1 = jax.random.normal(kx1, (B1, D1), dtype=jnp.float32)
    out1 = jax.block_until_ready(upsampling_cnn(x1, conv_weight))
    ref1 = upsampling_cnn_reference(x1, conv_weight)
    assert out1.shape == (B1, num_bins, D1, 1), out1.shape
    assert jnp.allclose(out1, ref1, atol=1e-6, rtol=1e-6), "mismatch (tiny)"

    # Case 2: shapes large enough to exercise the tiled grid (grid = (1, 2)).
    B2, D2 = 64, 1024
    x2 = jax.random.normal(kx2, (B2, D2), dtype=jnp.float32)
    out2 = jax.block_until_ready(upsampling_cnn(x2, conv_weight))
    ref2 = upsampling_cnn_reference(x2, conv_weight)
    assert out2.shape == (B2, num_bins, D2, 1), out2.shape
    assert jnp.allclose(out2, ref2, atol=1e-6, rtol=1e-6), "mismatch (tiled)"

    print("KERNEL_OK")
</pallas_src>

<mosaic_0001>
module attributes {stable_mosaic.version = 11 : i64} {
  func.func @_upsampling_cnn_kernel(%arg0: i32, %arg1: i32, %arg2: memref<2x16xf32, #tpu.memory_space<vmem>>, %arg3: memref<1x8x1xf32, #tpu.memory_space<vmem>>, %arg4: memref<2x8x16xf32, #tpu.memory_space<vmem>>) attributes {dimension_semantics = [#tpu.dimension_semantics<parallel>, #tpu.dimension_semantics<parallel>], iteration_bounds = array<i64: 1, 1>, scalar_prefetch = 0 : i64, scratch_operands = 0 : i64, tpu.core_type = #tpu.core_type<tc>, window_params = [{transform_indices = @transform_0, window_bounds = array<i64: 2, 16>}, {pipeline_mode = #tpu.pipeline_mode<synchronous>, transform_indices = @transform_1, window_bounds = array<i64: 1, 8, 1>}, {transform_indices = @transform_2, window_bounds = array<i64: 2, 8, 16>}]} {
    %c0 = arith.constant 0 : index
    %c0_0 = arith.constant 0 : index
    %0 = vector.load %arg2[%c0, %c0_0] : memref<2x16xf32, #tpu.memory_space<vmem>>, vector<2x16xf32>
    %1 = vector.shape_cast %0 : vector<2x16xf32> to vector<2x1x16xf32>
    %c0_1 = arith.constant 0 : index
    %c0_2 = arith.constant 0 : index
    %c0_3 = arith.constant 0 : index
    %2 = vector.load %arg3[%c0_1, %c0_2, %c0_3] : memref<1x8x1xf32, #tpu.memory_space<vmem>>, vector<1x8x1xf32>
    %3 = vector.broadcast %1 : vector<2x1x16xf32> to vector<2x8x16xf32>
    %4 = vector.broadcast %2 : vector<1x8x1xf32> to vector<2x8x16xf32>
    %5 = arith.mulf %3, %4 : vector<2x8x16xf32>
    %c0_4 = arith.constant 0 : index
    %c0_5 = arith.constant 0 : index
    %c0_6 = arith.constant 0 : index
    %6 = vector.load %arg4[%c0_4, %c0_5, %c0_6] : memref<2x8x16xf32, #tpu.memory_space<vmem>>, vector<2x8x16xf32>
    tpu.vector_store %arg4[%c0_4, %c0_5, %c0_6], %5 {strides = array<i32>} : memref<2x8x16xf32, #tpu.memory_space<vmem>>, vector<2x8x16xf32>,
    return
  }
  func.func @transform_0(%arg0: i32, %arg1: i32) -> (i32, i32) {
    %c0_i32 = arith.constant 0 : i32
    return %arg0, %arg1 : i32, i32
  }
  func.func @transform_1(%arg0: i32, %arg1: i32) -> (i32, i32, i32) {
    %c0_i32 = arith.constant 0 : i32
    %c0_i32_0 = arith.constant 0 : i32
    %c0_i32_1 = arith.constant 0 : i32
    %c0_i32_2 = arith.constant 0 : i32
    return %c0_i32, %c0_i32_0, %c0_i32_1 : i32, i32, i32
  }
  func.func @transform_2(%arg0: i32, %arg1: i32) -> (i32, i32, i32) {
    %c0_i32 = arith.constant 0 : i32
    %c0_i32_0 = arith.constant 0 : i32
    return %arg0, %c0_i32, %arg1 : i32, i32, i32
  }
}

</mosaic_0001>

<llo_original>
// kernel: tpu_custom_call.1
$region0: #{tpu_custom_call.1}
  #allocation0 [shape = 'u32[]', space=smem, size = 0x4, offset = 0x4, fixed_abs, tag = 'smem constant byte address 0x4 - core index']
  #allocation1 [shape = 'u32[72,128]{1,0:T(1,128)}', space=vmem, size = 0x9000, scoped, tag = 'internal scratch']
  %s0 = inlined_call_operand.vmem [shape: f32[2,16], index: 0, kind: input, shape index: {}]
  %s1 = inlined_call_operand.vmem [shape: f32[1,8,1], index: 1, kind: input, shape index: {}]
  %s2 = inlined_call_operand.hbm [shape: f32[2,8,16], index: 2, kind: output, shape index: {}]
  %s3 = sld [smem:[#allocation0]]
  $region18: #{tpu_custom_call.1} parent=0
    _
  %s5 = ssub.s32 1, %s3
  %s6 = scalar_select 0, %s5, %s3
  $region1: #{tpu_custom_call.1} parent=0
    #allocation2 [shape = 'u8[8192]{0}', space=vmem, size = 0x2000, scoped, tag = 'output window, operand 0, single buffered']
    #allocation3 [shape = 's32[1]{0}', space=sflag, size = 0x4, scoped, tag = 'scoped memory for tpu_custom_call.1']
    %7 = vsyncpa [#allocation3], 0
    // Predicated region
    $region2: #{tpu_custom_call.1} parent=1 // pred_check
      _
    $region3: #{tpu_custom_call.1} parent=1 // pred_check_branch
      %9 = sbr.rel (0) target = $region5
    $region4: #{tpu_custom_call.1} parent=1 // pred_region
      _
    $region5: #{tpu_custom_call.1} parent=1 // pred_fallthru
      _
    // Predicated region
    $region6: #{tpu_custom_call.1} parent=1 // pred_check
      _
    $region7: #{tpu_custom_call.1} parent=1 // pred_check_branch
      %11 = sbr.rel (0) target = $region9
    $region8: #{tpu_custom_call.1} parent=1 // pred_region
      _
    $region9: #{tpu_custom_call.1} parent=1 // pred_fallthru
      _
    %v12 = vld [vmem:[%s0] sm:$0x3]
    %v14 = vrot.slane %v12, 1
    %v15 = vld [vmem:[%s1] sm:$0xff]
    %v16 = vperm.slane %v12, 0
    %v17 = vperm.slane %v14, 0
    %21 = vset.pattern.permute.xlu0 0
    %22 = vperm.xlu0 %21, %v15
    %v23 = vpop.permute.xlu0 %22
    %v25 = vmul.f32 %v16, %v23
    %v26 = vmul.f32 %v17, %v23
    %vm27 = vcmask 130048
    %28 = vst.msk [vmem:[#allocation2] sm:$0xff] %vm27, %v25
    %29 = vst.msk [vmem:[#allocation2 + $0x8] sm:$0xff] %vm27, %v26
    // Predicated region
    $region10: #{tpu_custom_call.1} parent=1 // pred_check
      _
    $region11: #{tpu_custom_call.1} parent=1 // pred_check_branch
      %31 = sbr.rel (0) target = $region13
    $region12: #{tpu_custom_call.1} parent=1 // pred_region
      %33 = vsyncadd [#allocation3], 0
      %s34 = sshll.u32 [#allocation2], 4
      %s35 = int_to_ptr.vmem [resolvable:$true] %s34
      %s36 = sshll.u32 %s2, 4
      %s37 = int_to_ptr.hbm [resolvable:$true] %s36
      %42 = dma.vmem_to_hbm [thread:$0]  %s35, 256, %s37, [#allocation3], 128, 128, 8
    $region13: #{tpu_custom_call.1} parent=1 // pred_fallthru
      _
    // Predicated region
    $region14: #{tpu_custom_call.1} parent=1 // pred_check
      _
    $region15: #{tpu_custom_call.1} parent=1 // pred_check_branch
      %44 = sbr.rel (0) target = $region17
    $region16: #{tpu_custom_call.1} parent=1 // pred_region
      %46 = dma.done [#allocation3], 256
    $region17: #{tpu_custom_call.1} parent=1 // pred_fallthru
      _
    %47 = vsyncpa [#allocation3], 1

</llo_original>
